<compile_context>
chip_gen: v6e
topology: v6e:2x2x1
jax: 0.10.0
libtpu: 0.0.40
codegen_flags: <defaults>
</compile_context>

<pallas_src>
import jax
import jax.numpy as jnp
from jax.experimental import pallas as pl
from jax.experimental.pallas import tpu as pltpu

RES = 32  # small stand-in for the original RES = 320


def _subsample_ifft_abs_kernel(mr_ref, mi_ref, wr_ref, wi_ref, xr_ref, xi_ref, o_ref):
    """One batch *chunk* per grid step.

    mr/mi/xr/xi/o refs : (BC*H, W)  -- batch folded into the sublane (row) dim
    wr/wi refs         : (H, H)     -- orthonormal inverse-DFT matrix (symmetric)
    """
    H = wr_ref.shape[0]
    BC = xr_ref.shape[0] // H
    f32 = jnp.float32

    wr = wr_ref[...]
    wi = wi_ref[...]
    ws = wr + wi                      # shared Gauss-trick combination, hoisted

    # k-space mask (VPU, elementwise, all BC images at once)
    xr = xr_ref[...] * mr_ref[...]
    xi = xi_ref[...] * mi_ref[...]

    # ---- stage A: column DFT  Q_b = X_b @ W, batch folded into the M dim -------------
    # Gauss / Karatsuba complex matmul: 3 real matmuls instead of 4.
    a1 = jnp.dot(xr, wr, preferred_element_type=f32)
    a2 = jnp.dot(xi, wi, preferred_element_type=f32)
    a3 = jnp.dot(xr + xi, ws, preferred_element_type=f32)
    qr = a1 - a2                      # Re(Q), f32 accumulation
    qi = a3 - a1 - a2                 # Im(Q)

    # cast back to the MXU input dtype for the second pass (no-op when compute dtype is f32)
    qr_c = qr.astype(wr.dtype)
    qi_c = qi.astype(wr.dtype)
    qs_c = (qr + qi).astype(wr.dtype)

    # ---- stage B: row DFT  Y_b = W @ Q_b, per image (static unrolled loop) ------------
    for b in range(BC):
        lo = b * H
        qrb = qr_c[lo:lo + H, :]
        qib = qi_c[lo:lo + H, :]
        qsb = qs_c[lo:lo + H, :]
        b1 = jnp.dot(wr, qrb, preferred_element_type=f32)
        b2 = jnp.dot(wi, qib, preferred_element_type=f32)
        b3 = jnp.dot(ws, qsb, preferred_element_type=f32)
        yr = b1 - b2
        yi = b3 - b1 - b2
        # complex magnitude
        o_ref[pl.ds(lo, H), :] = jnp.sqrt(yr * yr + yi * yi)


def _pick_batch_chunk(batch, max_chunk):
    """Largest divisor of `batch` that is <= max_chunk (blocks tile the batch exactly)."""
    bc = max(1, min(batch, max_chunk))
    while batch % bc:
        bc -= 1
    return bc


def subsampling_forward(x, mask, keep_fraction, *, compute_dtype=jnp.float32,
                        max_batch_chunk=4):
    """x: (B, RES, RES, 2) float32, mask: (1, RES, RES, 2) float32.

    Returns (out, threshold) with out shaped (B, 1, RES, RES) like the PyTorch module.
    compute_dtype: MXU input dtype (jnp.float32 or jnp.bfloat16); accumulation stays f32.
    """
    B, H, W, C = x.shape
    assert H == W and C == 2, "expect (B, RES, RES, 2)"
    assert H % 8 == 0, "RES must be sublane-aligned"

    # --- threshold / binary mask (parameter setup, plain JAX) --------------------------
    # Matches torch.topk(mask.flatten(), k).values.min(); ties kept by `>=` as in torch.
    flat = mask.reshape(-1)
    k = int(keep_fraction * flat.shape[0])
    k = min(max(k, 1), flat.shape[0])            # guard k == 0 / k > numel
    thr = jax.lax.top_k(flat, k)[0][-1]
    binary_mask = (mask[0] >= thr).astype(jnp.float32)      # (RES, RES, 2), per re/im channel

    # --- orthonormal inverse DFT matrix: W[j,k] = exp(+2*pi*i*j*k/N) / sqrt(N) ----------
    # ("ifft2_regular" == plain unshifted orthonormal inverse FFT.)  j*k is reduced mod N
    # so the f32 angle stays small and accurate even at RES=320.
    n = jnp.arange(H, dtype=jnp.float32)
    ang = (2.0 * jnp.pi / H) * jnp.mod(jnp.outer(n, n), H)
    scale = 1.0 / jnp.sqrt(jnp.float32(H))
    wr = (jnp.cos(ang) * scale).astype(compute_dtype)
    wi = (jnp.sin(ang) * scale).astype(compute_dtype)

    # --- batch folding: (B, H, W) -> (B*H, W) slabs; grid iterates batch chunks ---------
    bc = _pick_batch_chunk(B, max_batch_chunk)
    grid_b = B // bc
    xr = x[..., 0].reshape(B * H, W).astype(compute_dtype)
    xi = x[..., 1].reshape(B * H, W).astype(compute_dtype)
    # mask tiled to chunk height once (constant across the grid, single-buffered below)
    mr = jnp.tile(binary_mask[..., 0], (bc, 1)).astype(compute_dtype)   # (bc*H, W)
    mi = jnp.tile(binary_mask[..., 1], (bc, 1)).astype(compute_dtype)

    # --- cost estimate: 6 real matmuls (Gauss trick) across the 2 DFT stages ------------
    flops = 12 * B * H * H * W
    bytes_accessed = int(xr.nbytes + xi.nbytes + mr.nbytes + mi.nbytes
                         + wr.nbytes + wi.nbytes + B * H * W * 4)
    cost = pl.CostEstimate(flops=flops, transcendentals=B * H * W,
                           bytes_accessed=bytes_accessed)

    # constant-index inputs -> single-buffered (their block index never changes)
    mask_spec = pl.BlockSpec((bc * H, W), lambda g: (0, 0), pipeline_mode=pl.Buffered(1))
    dft_spec = pl.BlockSpec((H, H), lambda g: (0, 0), pipeline_mode=pl.Buffered(1))
    x_spec = pl.BlockSpec((bc * H, W), lambda g: (g, 0))
    out_spec = pl.BlockSpec((bc * H, W), lambda g: (g, 0))

    out_flat = pl.pallas_call(
        _subsample_ifft_abs_kernel,
        out_shape=jax.ShapeDtypeStruct((B * H, W), jnp.float32),
        grid_spec=pltpu.PrefetchScalarGridSpec(
            num_scalar_prefetch=0,
            grid=(grid_b,),
            in_specs=[mask_spec, mask_spec, dft_spec, dft_spec, x_spec, x_spec],
            out_specs=out_spec,
        ),
        compiler_params=pltpu.CompilerParams(
            dimension_semantics=("parallel",),
            vmem_limit_bytes=32 * 1024 * 1024,
        ),
        cost_estimate=cost,
    )(mr, mi, wr, wi, xr, xi)

    # unsqueeze(1) -> NCHW
    return out_flat.reshape(B, H, W)[:, None, :, :], thr


if __name__ == "__main__":
    key = jax.random.PRNGKey(0)
    kx, km = jax.random.split(key)

    B = 2
    drop_rate = 0.25
    keep_fraction = 1.0 - drop_rate            # matches `self.drop_rate = 1 - drop_rate`

    x = jax.random.normal(kx, (B, RES, RES, 2), dtype=jnp.float32)
    mask = jax.random.normal(km, (1, RES, RES, 2), dtype=jnp.float32)

    out, thr = subsampling_forward(x, mask, keep_fraction)
    out = jax.block_until_ready(out)
    assert out.shape == (B, 1, RES, RES), out.shape

    # pure-JAX reference (same semantics): mask -> orthonormal ifft2 -> abs
    bmask = (mask >= thr).astype(jnp.float32)
    xm = x * bmask
    xc = xm[..., 0] + 1j * xm[..., 1]
    yc = jnp.fft.ifft2(xc, axes=(-2, -1), norm="ortho")
    ref = jnp.abs(yc)[:, None, :, :]
    err = float(jnp.max(jnp.abs(out - ref)))
    assert err < 1e-3, f"f32 max abs error {err}"

    # bf16 MXU-input path (v6e/v7x ~3x MXU throughput); loose bound for twiddle quantization.
    out_bf16, _ = subsampling_forward(x, mask, keep_fraction, compute_dtype=jnp.bfloat16)
    out_bf16 = jax.block_until_ready(out_bf16)
    err_bf16 = float(jnp.max(jnp.abs(out_bf16 - ref)))
    assert err_bf16 < 5e-2, f"bf16 max abs error {err_bf16}"

    print("KERNEL_OK")
</pallas_src>

<mosaic_0001>
module attributes {stable_mosaic.version = 11 : i64} {
  func.func @_subsample_ifft_abs_kernel(%arg0: i32, %arg1: memref<64x32xf32, #tpu.memory_space<vmem>>, %arg2: memref<64x32xf32, #tpu.memory_space<vmem>>, %arg3: memref<32x32xf32, #tpu.memory_space<vmem>>, %arg4: memref<32x32xf32, #tpu.memory_space<vmem>>, %arg5: memref<64x32xf32, #tpu.memory_space<vmem>>, %arg6: memref<64x32xf32, #tpu.memory_space<vmem>>, %arg7: memref<64x32xf32, #tpu.memory_space<vmem>>) attributes {dimension_semantics = [#tpu.dimension_semantics<parallel>], iteration_bounds = array<i64: 1>, scalar_prefetch = 0 : i64, scratch_operands = 0 : i64, tpu.core_type = #tpu.core_type<tc>, window_params = [{pipeline_mode = #tpu.pipeline_mode<synchronous>, transform_indices = @transform_0, window_bounds = array<i64: 64, 32>}, {pipeline_mode = #tpu.pipeline_mode<synchronous>, transform_indices = @transform_1, window_bounds = array<i64: 64, 32>}, {pipeline_mode = #tpu.pipeline_mode<synchronous>, transform_indices = @transform_2, window_bounds = array<i64: 32, 32>}, {pipeline_mode = #tpu.pipeline_mode<synchronous>, transform_indices = @transform_3, window_bounds = array<i64: 32, 32>}, {transform_indices = @transform_4, window_bounds = array<i64: 64, 32>}, {transform_indices = @transform_5, window_bounds = array<i64: 64, 32>}, {transform_indices = @transform_6, window_bounds = array<i64: 64, 32>}]} {
    %c0 = arith.constant 0 : index
    %c0_0 = arith.constant 0 : index
    %0 = vector.load %arg3[%c0, %c0_0] : memref<32x32xf32, #tpu.memory_space<vmem>>, vector<32x32xf32>
    %c0_1 = arith.constant 0 : index
    %c0_2 = arith.constant 0 : index
    %1 = vector.load %arg4[%c0_1, %c0_2] : memref<32x32xf32, #tpu.memory_space<vmem>>, vector<32x32xf32>
    %2 = arith.addf %0, %1 : vector<32x32xf32>
    %c0_3 = arith.constant 0 : index
    %c0_4 = arith.constant 0 : index
    %3 = vector.load %arg5[%c0_3, %c0_4] : memref<64x32xf32, #tpu.memory_space<vmem>>, vector<64x32xf32>
    %c0_5 = arith.constant 0 : index
    %c0_6 = arith.constant 0 : index
    %4 = vector.load %arg1[%c0_5, %c0_6] : memref<64x32xf32, #tpu.memory_space<vmem>>, vector<64x32xf32>
    %5 = arith.mulf %3, %4 : vector<64x32xf32>
    %c0_7 = arith.constant 0 : index
    %c0_8 = arith.constant 0 : index
    %6 = vector.load %arg6[%c0_7, %c0_8] : memref<64x32xf32, #tpu.memory_space<vmem>>, vector<64x32xf32>
    %c0_9 = arith.constant 0 : index
    %c0_10 = arith.constant 0 : index
    %7 = vector.load %arg2[%c0_9, %c0_10] : memref<64x32xf32, #tpu.memory_space<vmem>>, vector<64x32xf32>
    %8 = arith.mulf %6, %7 : vector<64x32xf32>
    %cst = arith.constant dense<0.000000e+00> : vector<64x32xf32>
    %9 = tpu.matmul %5, %0, %cst {dimension_numbers = #tpu.dot_dimension_numbers<[1], [0], [0], [1], [0, 0, 1, 1], [], []>} : vector<64x32xf32>, vector<32x32xf32>, vector<64x32xf32> -> vector<64x32xf32>
    %cst_11 = arith.constant dense<0.000000e+00> : vector<64x32xf32>
    %10 = tpu.matmul %8, %1, %cst_11 {dimension_numbers = #tpu.dot_dimension_numbers<[1], [0], [0], [1], [0, 0, 1, 1], [], []>} : vector<64x32xf32>, vector<32x32xf32>, vector<64x32xf32> -> vector<64x32xf32>
    %11 = arith.addf %5, %8 : vector<64x32xf32>
    %cst_12 = arith.constant dense<0.000000e+00> : vector<64x32xf32>
    %12 = tpu.matmul %11, %2, %cst_12 {dimension_numbers = #tpu.dot_dimension_numbers<[1], [0], [0], [1], [0, 0, 1, 1], [], []>} : vector<64x32xf32>, vector<32x32xf32>, vector<64x32xf32> -> vector<64x32xf32>
    %13 = arith.subf %9, %10 : vector<64x32xf32>
    %14 = arith.subf %12, %9 : vector<64x32xf32>
    %15 = arith.subf %14, %10 : vector<64x32xf32>
    %16 = arith.addf %13, %15 : vector<64x32xf32>
    %17 = vector.extract_strided_slice %13 {offsets = [0, 0], sizes = [32, 32], strides = [1, 1]} : vector<64x32xf32> to vector<32x32xf32>
    %18 = vector.extract_strided_slice %15 {offsets = [0, 0], sizes = [32, 32], strides = [1, 1]} : vector<64x32xf32> to vector<32x32xf32>
    %19 = vector.extract_strided_slice %16 {offsets = [0, 0], sizes = [32, 32], strides = [1, 1]} : vector<64x32xf32> to vector<32x32xf32>
    %cst_13 = arith.constant dense<0.000000e+00> : vector<32x32xf32>
    %20 = tpu.matmul %0, %17, %cst_13 {dimension_numbers = #tpu.dot_dimension_numbers<[1], [0], [0], [1], [0, 0, 1, 1], [], []>} : vector<32x32xf32>, vector<32x32xf32>, vector<32x32xf32> -> vector<32x32xf32>
    %cst_14 = arith.constant dense<0.000000e+00> : vector<32x32xf32>
    %21 = tpu.matmul %1, %18, %cst_14 {dimension_numbers = #tpu.dot_dimension_numbers<[1], [0], [0], [1], [0, 0, 1, 1], [], []>} : vector<32x32xf32>, vector<32x32xf32>, vector<32x32xf32> -> vector<32x32xf32>
    %cst_15 = arith.constant dense<0.000000e+00> : vector<32x32xf32>
    %22 = tpu.matmul %2, %19, %cst_15 {dimension_numbers = #tpu.dot_dimension_numbers<[1], [0], [0], [1], [0, 0, 1, 1], [], []>} : vector<32x32xf32>, vector<32x32xf32>, vector<32x32xf32> -> vector<32x32xf32>
    %23 = arith.subf %20, %21 : vector<32x32xf32>
    %24 = arith.subf %22, %20 : vector<32x32xf32>
    %25 = arith.subf %24, %21 : vector<32x32xf32>
    %26 = arith.mulf %23, %23 : vector<32x32xf32>
    %27 = arith.mulf %25, %25 : vector<32x32xf32>
    %28 = arith.addf %26, %27 : vector<32x32xf32>
    %29 = math.sqrt %28 : vector<32x32xf32>
    %c0_16 = arith.constant 0 : index
    %c0_17 = arith.constant 0 : index
    %30 = vector.load %arg7[%c0_16, %c0_17] : memref<64x32xf32, #tpu.memory_space<vmem>>, vector<32x32xf32>
    tpu.vector_store %arg7[%c0_16, %c0_17], %29 {strides = array<i32>} : memref<64x32xf32, #tpu.memory_space<vmem>>, vector<32x32xf32>,
    %31 = vector.extract_strided_slice %13 {offsets = [32, 0], sizes = [32, 32], strides = [1, 1]} : vector<64x32xf32> to vector<32x32xf32>
    %32 = vector.extract_strided_slice %15 {offsets = [32, 0], sizes = [32, 32], strides = [1, 1]} : vector<64x32xf32> to vector<32x32xf32>
    %33 = vector.extract_strided_slice %16 {offsets = [32, 0], sizes = [32, 32], strides = [1, 1]} : vector<64x32xf32> to vector<32x32xf32>
    %cst_18 = arith.constant dense<0.000000e+00> : vector<32x32xf32>
    %34 = tpu.matmul %0, %31, %cst_18 {dimension_numbers = #tpu.dot_dimension_numbers<[1], [0], [0], [1], [0, 0, 1, 1], [], []>} : vector<32x32xf32>, vector<32x32xf32>, vector<32x32xf32> -> vector<32x32xf32>
    %cst_19 = arith.constant dense<0.000000e+00> : vector<32x32xf32>
    %35 = tpu.matmul %1, %32, %cst_19 {dimension_numbers = #tpu.dot_dimension_numbers<[1], [0], [0], [1], [0, 0, 1, 1], [], []>} : vector<32x32xf32>, vector<32x32xf32>, vector<32x32xf32> -> vector<32x32xf32>
    %cst_20 = arith.constant dense<0.000000e+00> : vector<32x32xf32>
    %36 = tpu.matmul %2, %33, %cst_20 {dimension_numbers = #tpu.dot_dimension_numbers<[1], [0], [0], [1], [0, 0, 1, 1], [], []>} : vector<32x32xf32>, vector<32x32xf32>, vector<32x32xf32> -> vector<32x32xf32>
    %37 = arith.subf %34, %35 : vector<32x32xf32>
    %38 = arith.subf %36, %34 : vector<32x32xf32>
    %39 = arith.subf %38, %35 : vector<32x32xf32>
    %40 = arith.mulf %37, %37 : vector<32x32xf32>
    %41 = arith.mulf %39, %39 : vector<32x32xf32>
    %42 = arith.addf %40, %41 : vector<32x32xf32>
    %43 = math.sqrt %42 : vector<32x32xf32>
    %c32 = arith.constant 32 : index
    %c0_21 = arith.constant 0 : index
    %44 = vector.load %arg7[%c32, %c0_21] : memref<64x32xf32, #tpu.memory_space<vmem>>, vector<32x32xf32>
    tpu.vector_store %arg7[%c32, %c0_21], %43 {strides = array<i32>} : memref<64x32xf32, #tpu.memory_space<vmem>>, vector<32x32xf32>,
    return
  }
  func.func @transform_0(%arg0: i32) -> (i32, i32) {
    %c0_i32 = arith.constant 0 : i32
    %c0_i32_0 = arith.constant 0 : i32
    %c0_i32_1 = arith.constant 0 : i32
    return %c0_i32, %c0_i32_0 : i32, i32
  }
  func.func @transform_1(%arg0: i32) -> (i32, i32) {
    %c0_i32 = arith.constant 0 : i32
    %c0_i32_0 = arith.constant 0 : i32
    %c0_i32_1 = arith.constant 0 : i32
    return %c0_i32, %c0_i32_0 : i32, i32
  }
  func.func @transform_2(%arg0: i32) -> (i32, i32) {
    %c0_i32 = arith.constant 0 : i32
    %c0_i32_0 = arith.constant 0 : i32
    %c0_i32_1 = arith.constant 0 : i32
    return %c0_i32, %c0_i32_0 : i32, i32
  }
  func.func @transform_3(%arg0: i32) -> (i32, i32) {
    %c0_i32 = arith.constant 0 : i32
    %c0_i32_0 = arith.constant 0 : i32
    %c0_i32_1 = arith.constant 0 : i32
    return %c0_i32, %c0_i32_0 : i32, i32
  }
  func.func @transform_4(%arg0: i32) -> (i32, i32) {
    %c0_i32 = arith.constant 0 : i32
    %c0_i32_0 = arith.constant 0 : i32
    return %arg0, %c0_i32 : i32, i32
  }
  func.func @transform_5(%arg0: i32) -> (i32, i32) {
    %c0_i32 = arith.constant 0 : i32
    %c0_i32_0 = arith.constant 0 : i32
    return %arg0, %c0_i32 : i32, i32
  }
  func.func @transform_6(%arg0: i32) -> (i32, i32) {
    %c0_i32 = arith.constant 0 : i32
    %c0_i32_0 = arith.constant 0 : i32
    return %arg0, %c0_i32 : i32, i32
  }
}

</mosaic_0001>

<llo_original>
// kernel: tpu_custom_call.1
$region0: #{tpu_custom_call.1}
  #allocation0 [shape = 'u32[]', space=smem, size = 0x4, offset = 0x4, fixed_abs, tag = 'smem constant byte address 0x4 - core index']
  #allocation1 [shape = 'u32[144,128]{1,0:T(1,128)}', space=vmem, size = 0x12000, scoped, tag = 'internal scratch']
  %s0 = inlined_call_operand.vmem [shape: f32[64,32], index: 0, kind: input, shape index: {}]
  %s1 = inlined_call_operand.vmem [shape: f32[64,32], index: 1, kind: input, shape index: {}]
  %s2 = inlined_call_operand.vmem [shape: f32[32,32], index: 2, kind: input, shape index: {}]
  %s3 = inlined_call_operand.vmem [shape: f32[32,32], index: 3, kind: input, shape index: {}]
  %s4 = inlined_call_operand.vmem [shape: f32[64,32], index: 4, kind: input, shape index: {}]
  %s5 = inlined_call_operand.vmem [shape: f32[64,32], index: 5, kind: input, shape index: {}]
  %s6 = inlined_call_operand.vmem [shape: f32[64,32], index: 6, kind: output, shape index: {}]
  %s7 = sld [smem:[#allocation0]]
  $region34: #{tpu_custom_call.1} parent=0
    _
  %s9 = ssub.s32 1, %s7
  %s10 = scalar_select 0, %s9, %s7
  // Predicated region
  $region2: #{tpu_custom_call.1} parent=0 // pred_check
    _
  $region3: #{tpu_custom_call.1} parent=0 // pred_check_branch
    %12 = sbr.rel (0) target = $region5
  $region4: #{tpu_custom_call.1} parent=0 // pred_region
    _
  $region5: #{tpu_custom_call.1} parent=0 // pred_fallthru
    _
  // Predicated region
  $region6: #{tpu_custom_call.1} parent=0 // pred_check
    _
  $region7: #{tpu_custom_call.1} parent=0 // pred_check_branch
    %14 = sbr.rel (0) target = $region9
  $region8: #{tpu_custom_call.1} parent=0 // pred_region
    _
  $region9: #{tpu_custom_call.1} parent=0 // pred_fallthru
    _
  // Predicated region
  $region10: #{tpu_custom_call.1} parent=0 // pred_check
    _
  $region11: #{tpu_custom_call.1} parent=0 // pred_check_branch
    %16 = sbr.rel (0) target = $region13
  $region12: #{tpu_custom_call.1} parent=0 // pred_region
    _
  $region13: #{tpu_custom_call.1} parent=0 // pred_fallthru
    _
  // Predicated region
  $region14: #{tpu_custom_call.1} parent=0 // pred_check
    _
  $region15: #{tpu_custom_call.1} parent=0 // pred_check_branch
    %18 = sbr.rel (0) target = $region17
  $region16: #{tpu_custom_call.1} parent=0 // pred_region
    _
  $region17: #{tpu_custom_call.1} parent=0 // pred_fallthru
    _
  // Predicated region
  $region18: #{tpu_custom_call.1} parent=0 // pred_check
    _
  $region19: #{tpu_custom_call.1} parent=0 // pred_check_branch
    %20 = sbr.rel (0) target = $region21
  $region20: #{tpu_custom_call.1} parent=0 // pred_region
    _
  $region21: #{tpu_custom_call.1} parent=0 // pred_fallthru
    _
  // Predicated region
  $region22: #{tpu_custom_call.1} parent=0 // pred_check
    _
  $region23: #{tpu_custom_call.1} parent=0 // pred_check_branch
    %22 = sbr.rel (0) target = $region25
  $region24: #{tpu_custom_call.1} parent=0 // pred_region
    _
  $region25: #{tpu_custom_call.1} parent=0 // pred_fallthru
    _
  %v23 = vld [vmem:[%s2] sm:$0xff]
  %v24 = vld [vmem:[%s2 + $0x8] sm:$0xff]
  %v25 = vld [vmem:[%s2 + $0x10] sm:$0xff]
  %v26 = vld [vmem:[%s2 + $0x18] sm:$0xff]
  %v27 = vld [vmem:[%s3] sm:$0xff]
  %v28 = vld [vmem:[%s3 + $0x8] sm:$0xff]
  %v29 = vld [vmem:[%s3 + $0x10] sm:$0xff]
  %v30 = vld [vmem:[%s3 + $0x18] sm:$0xff]
  %v31 = vadd.f32 %v23, %v27
  %v32 = vadd.f32 %v24, %v28
  %v33 = vadd.f32 %v25, %v29
  %v34 = vadd.f32 %v26, %v30
  %v35 = vld [vmem:[%s4] sm:$0xff]
  %v36 = vld [vmem:[%s4 + $0x8] sm:$0xff]
  %v37 = vld [vmem:[%s4 + $0x10] sm:$0xff]
  %v38 = vld [vmem:[%s4 + $0x18] sm:$0xff]
  %v39 = vld [vmem:[%s4 + $0x20] sm:$0xff]
  %v40 = vld [vmem:[%s4 + $0x28] sm:$0xff]
  %v41 = vld [vmem:[%s4 + $0x30] sm:$0xff]
  %v42 = vld [vmem:[%s4 + $0x38] sm:$0xff]
  %v43 = vld [vmem:[%s0] sm:$0xff]
  %v44 = vld [vmem:[%s0 + $0x8] sm:$0xff]
  %v45 = vld [vmem:[%s0 + $0x10] sm:$0xff]
  %v46 = vld [vmem:[%s0 + $0x18] sm:$0xff]
  %v47 = vld [vmem:[%s0 + $0x20] sm:$0xff]
  %v48 = vld [vmem:[%s0 + $0x28] sm:$0xff]
  %v49 = vld [vmem:[%s0 + $0x30] sm:$0xff]
  %v50 = vld [vmem:[%s0 + $0x38] sm:$0xff]
  %v51 = vmul.f32 %v35, %v43
  %v52 = vmul.f32 %v36, %v44
  %v53 = vmul.f32 %v37, %v45
  %v54 = vmul.f32 %v38, %v46
  %v55 = vmul.f32 %v39, %v47
  %v56 = vmul.f32 %v40, %v48
  %v57 = vmul.f32 %v41, %v49
  %v58 = vmul.f32 %v42, %v50
  %v59 = vld [vmem:[%s5] sm:$0xff]
  %v60 = vld [vmem:[%s5 + $0x8] sm:$0xff]
  %v61 = vld [vmem:[%s5 + $0x10] sm:$0xff]
  %v62 = vld [vmem:[%s5 + $0x18] sm:$0xff]
  %v63 = vld [vmem:[%s5 + $0x20] sm:$0xff]
  %v64 = vld [vmem:[%s5 + $0x28] sm:$0xff]
  %v65 = vld [vmem:[%s5 + $0x30] sm:$0xff]
  %v66 = vld [vmem:[%s5 + $0x38] sm:$0xff]
  %v67 = vld [vmem:[%s1] sm:$0xff]
  %v68 = vld [vmem:[%s1 + $0x8] sm:$0xff]
  %v69 = vld [vmem:[%s1 + $0x10] sm:$0xff]
  %v70 = vld [vmem:[%s1 + $0x18] sm:$0xff]
  %v71 = vld [vmem:[%s1 + $0x20] sm:$0xff]
  %v72 = vld [vmem:[%s1 + $0x28] sm:$0xff]
  %v73 = vld [vmem:[%s1 + $0x30] sm:$0xff]
  %v74 = vld [vmem:[%s1 + $0x38] sm:$0xff]
  %v75 = vmul.f32 %v59, %v67
  %v76 = vmul.f32 %v60, %v68
  %v77 = vmul.f32 %v61, %v69
  %v78 = vmul.f32 %v62, %v70
  %v79 = vmul.f32 %v63, %v71
  %v80 = vmul.f32 %v64, %v72
  %v81 = vmul.f32 %v65, %v73
  %v82 = vmul.f32 %v66, %v74
  %vm83 = vcmask 261120
  %v85 = vsel %vm83, %v51, 0
  %v88 = vsel %vm83, %v52, 0
  %v91 = vsel %vm83, %v53, 0
  %v94 = vsel %vm83, %v54, 0
  %v97 = vsel %vm83, %v55, 0
  %v100 = vsel %vm83, %v56, 0
  %v103 = vsel %vm83, %v57, 0
  %v106 = vsel %vm83, %v58, 0
  %108 = vmatprep.subr.mxu0 0.0
  %109 = vmatpush1.msra.mxu0 0.0
  %110 = vmatprep.subr.mxu0 0.0
  %111 = vmatpush1.msra.mxu0 0.0
  %112 = vmatprep.subr.mxu0 0.0
  %113 = vmatpush1.msra.mxu0 0.0
  %114 = vmatprep.subr.mxu0 0.0
  %115 = vmatpush1.msra.mxu0 0.0
  %116 = vmatprep.subr.mxu0 0.0
  %117 = vmatpush1.msra.mxu0 0.0
  %118 = vmatprep.subr.mxu0 0.0
  %119 = vmatpush1.msra.mxu0 0.0
  %120 = vmatprep.subr.mxu0 0.0
  %121 = vmatpush1.msra.mxu0 0.0
  %122 = vmatprep.subr.mxu0 0.0
  %123 = vmatpush1.msra.mxu0 0.0
  %124 = vmatprep.subr.mxu0 0.0
  %125 = vmatpush1.msra.mxu0 0.0
  %126 = vmatprep.subr.mxu0 0.0
  %127 = vmatpush1.msra.mxu0 0.0
  %128 = vmatprep.subr.mxu0 0.0
  %129 = vmatpush1.msra.mxu0 0.0
  %130 = vmatprep.subr.mxu0 0.0
  %131 = vmatpush1.msra.mxu0 0.0
  %132 = vmatprep.subr.mxu0 0.0
  %133 = vmatpush1.msra.mxu0 %v26
  %134 = vmatprep.subr.mxu0 0.0
  %135 = vmatpush1.msra.mxu0 %v25
  %136 = vmatprep.subr.mxu0 0.0
  %137 = vmatpush1.msra.mxu0 %v24
  %138 = vmatprep.subr.mxu0 0.0
  %139 = vmatpush1.msra.mxu0 %v23
  %140 = vmatprep.subr.mxu0 0.0
  %141 = vmatpush2.msra.mxu0 0.0
  %142 = vmatprep.subr.mxu0 0.0
  %143 = vmatpush2.msra.mxu0 0.0
  %144 = vmatprep.subr.mxu0 0.0
  %145 = vmatpush2.msra.mxu0 0.0
  %146 = vmatprep.subr.mxu0 0.0
  %147 = vmatpush2.msra.mxu0 0.0
  %148 = vmatprep.subr.mxu0 0.0
  %149 = vmatpush2.msra.mxu0 0.0
  %150 = vmatprep.subr.mxu0 0.0
  %151 = vmatpush2.msra.mxu0 0.0
  %152 = vmatprep.subr.mxu0 0.0
  %153 = vmatpush2.msra.mxu0 0.0
  %154 = vmatprep.subr.mxu0 0.0
  %155 = vmatpush2.msra.mxu0 0.0
  %156 = vmatprep.subr.mxu0 0.0
  %157 = vmatpush2.msra.mxu0 0.0
  %158 = vmatprep.subr.mxu0 0.0
  %159 = vmatpush2.msra.mxu0 0.0
  %160 = vmatprep.subr.mxu0 0.0
  %161 = vmatpush2.msra.mxu0 0.0
  %162 = vmatprep.subr.mxu0 0.0
  %163 = vmatpush2.msra.mxu0 0.0
  %164 = vmatprep.subr.mxu0 0.0
  %165 = vmatpush2.msra.mxu0 0.0
  %166 = vmatprep.subr.mxu0 0.0
  %167 = vmatpush2.msra.mxu0 0.0
  %168 = vmatprep.subr.mxu0 0.0
  %169 = vmatpush2.msra.mxu0 0.0
  %170 = vmatprep.subr.mxu0 0.0
  %171 = vmatpush2.msra.mxu0 0.0
  %172 = vmatprep.mubr.f32.mxu0 0.0
  %173 = vmatmul.mubr.f32.gmra.mxu0 %v85
  %v174 = vpop.f32.mrf.mxu0
  %v175 = vadd.f32 0.0, %v174
  %v176 = vpop.f32.mrf.mxu0
  %177 = vmatprep.mubr.f32.mxu0 0.0
  %178 = vmatmul.mubr.f32.gmra.mxu0 %v88
  %v179 = vpop.f32.mrf.mxu0
  %v180 = vadd.f32 0.0, %v179
  %v181 = vpop.f32.mrf.mxu0
  %182 = vmatprep.mubr.f32.mxu0 0.0
  %183 = vmatmul.mubr.f32.gmra.mxu0 %v91
  %v184 = vpop.f32.mrf.mxu0
  %v185 = vadd.f32 0.0, %v184
  %v186 = vpop.f32.mrf.mxu0
  %187 = vmatprep.mubr.f32.mxu0 0.0
  %188 = vmatmul.mubr.f32.gmra.mxu0 %v94
  %v189 = vpop.f32.mrf.mxu0
  %v190 = vadd.f32 0.0, %v189
  %v191 = vpop.f32.mrf.mxu0
  %192 = vmatprep.mubr.f32.mxu0 0.0
  %193 = vmatmul.mubr.f32.gmra.mxu0 %v97
  %v194 = vpop.f32.mrf.mxu0
  %v195 = vadd.f32 0.0, %v194
  %v196 = vpop.f32.mrf.mxu0
  %197 = vmatprep.mubr.f32.mxu0 0.0
  %198 = vmatmul.mubr.f32.gmra.mxu0 %v100
  %v199 = vpop.f32.mrf.mxu0
  %v200 = vadd.f32 0.0, %v199
  %v201 = vpop.f32.mrf.mxu0
  %202 = vmatprep.mubr.f32.mxu0 0.0
  %203 = vmatmul.mubr.f32.gmra.mxu0 %v103
  %v204 = vpop.f32.mrf.mxu0
  %v205 = vadd.f32 0.0, %v204
  %v206 = vpop.f32.mrf.mxu0
  %207 = vmatprep.mubr.f32.mxu0 0.0
  %208 = vmatmul.mubr.f32.gmra.mxu0 %v106
  %v209 = vpop.f32.mrf.mxu0
  %v210 = vadd.f32 0.0, %v209
  %v211 = vpop.f32.mrf.mxu0
  %212 = vdwg.mxu0
  %v214 = vsel %vm83, %v75, 0
  %v217 = vsel %vm83, %v76, 0
  %v220 = vsel %vm83, %v77, 0
  %v223 = vsel %vm83, %v78, 0
  %v226 = vsel %vm83, %v79, 0
  %v229 = vsel %vm83, %v80, 0
  %v232 = vsel %vm83, %v81, 0
  %v235 = vsel %vm83, %v82, 0
  %237 = vmatprep.subr.mxu0 0.0
  %238 = vmatpush1.msra.mxu0 0.0
  %239 = vmatprep.subr.mxu0 0.0
  %240 = vmatpush1.msra.mxu0 0.0
  %241 = vmatprep.subr.mxu0 0.0
  %242 = vmatpush1.msra.mxu0 0.0
  %243 = vmatprep.subr.mxu0 0.0
  %244 = vmatpush1.msra.mxu0 0.0
  %245 = vmatprep.subr.mxu0 0.0
  %246 = vmatpush1.msra.mxu0 0.0
  %247 = vmatprep.subr.mxu0 0.0
  %248 = vmatpush1.msra.mxu0 0.0
  %249 = vmatprep.subr.mxu0 0.0
  %250 = vmatpush1.msra.mxu0 0.0
  %251 = vmatprep.subr.mxu0 0.0
  %252 = vmatpush1.msra.mxu0 0.0
  %253 = vmatprep.subr.mxu0 0.0
  %254 = vmatpush1.msra.mxu0 0.0
  %255 = vmatprep.subr.mxu0 0.0
  %256 = vmatpush1.msra.mxu0 0.0
  %257 = vmatprep.subr.mxu0 0.0
  %258 = vmatpush1.msra.mxu0 0.0
  %259 = vmatprep.subr.mxu0 0.0
  %260 = vmatpush1.msra.mxu0 0.0
  %261 = vmatprep.subr.mxu0 0.0
  %262 = vmatpush1.msra.mxu0 %v30
  %263 = vmatprep.subr.mxu0 0.0
  %264 = vmatpush1.msra.mxu0 %v29
  %265 = vmatprep.subr.mxu0 0.0
  %266 = vmatpush1.msra.mxu0 %v28
  %267 = vmatprep.subr.mxu0 0.0
  %268 = vmatpush1.msra.mxu0 %v27
  %269 = vmatprep.subr.mxu0 0.0
  %270 = vmatpush2.msra.mxu0 0.0
  %271 = vmatprep.subr.mxu0 0.0
  %272 = vmatpush2.msra.mxu0 0.0
  %273 = vmatprep.subr.mxu0 0.0
  %274 = vmatpush2.msra.mxu0 0.0
  %275 = vmatprep.subr.mxu0 0.0
  %276 = vmatpush2.msra.mxu0 0.0
  %277 = vmatprep.subr.mxu0 0.0
  %278 = vmatpush2.msra.mxu0 0.0
  %279 = vmatprep.subr.mxu0 0.0
  %280 = vmatpush2.msra.mxu0 0.0
  %281 = vmatprep.subr.mxu0 0.0
  %282 = vmatpush2.msra.mxu0 0.0
  %283 = vmatprep.subr.mxu0 0.0
  %284 = vmatpush2.msra.mxu0 0.0
  %285 = vmatprep.subr.mxu0 0.0
  %286 = vmatpush2.msra.mxu0 0.0
  %287 = vmatprep.subr.mxu0 0.0
  %288 = vmatpush2.msra.mxu0 0.0
  %289 = vmatprep.subr.mxu0 0.0
  %290 = vmatpush2.msra.mxu0 0.0
  %291 = vmatprep.subr.mxu0 0.0
  %292 = vmatpush2.msra.mxu0 0.0
  %293 = vmatprep.subr.mxu0 0.0
  %294 = vmatpush2.msra.mxu0 0.0
  %295 = vmatprep.subr.mxu0 0.0
  %296 = vmatpush2.msra.mxu0 0.0
  %297 = vmatprep.subr.mxu0 0.0
  %298 = vmatpush2.msra.mxu0 0.0
  %299 = vmatprep.subr.mxu0 0.0
  %300 = vmatpush2.msra.mxu0 0.0
  %301 = vmatprep.mubr.f32.mxu0 0.0
  %302 = vmatmul.mubr.f32.gmra.mxu0 %v214
  %v303 = vpop.f32.mrf.mxu0
  %v304 = vadd.f32 0.0, %v303
  %v305 = vpop.f32.mrf.mxu0
  %306 = vmatprep.mubr.f32.mxu0 0.0
  %307 = vmatmul.mubr.f32.gmra.mxu0 %v217
  %v308 = vpop.f32.mrf.mxu0
  %v309 = vadd.f32 0.0, %v308
  %v310 = vpop.f32.mrf.mxu0
  %311 = vmatprep.mubr.f32.mxu0 0.0
  %312 = vmatmul.mubr.f32.gmra.mxu0 %v220
  %v313 = vpop.f32.mrf.mxu0
  %v314 = vadd.f32 0.0, %v313
  %v315 = vpop.f32.mrf.mxu0
  %316 = vmatprep.mubr.f32.mxu0 0.0
  %317 = vmatmul.mubr.f32.gmra.mxu0 %v223
  %v318 = vpop.f32.mrf.mxu0
  %v319 = vadd.f32 0.0, %v318
  %v320 = vpop.f32.mrf.mxu0
  %321 = vmatprep.mubr.f32.mxu0 0.0
  %322 = vmatmul.mubr.f32.gmra.mxu0 %v226
  %v323 = vpop.f32.mrf.mxu0
  %v324 = vadd.f32 0.0, %v323
  %v325 = vpop.f32.mrf.mxu0
  %326 = vmatprep.mubr.f32.mxu0 0.0
  %327 = vmatmul.mubr.f32.gmra.mxu0 %v229
  %v328 = vpop.f32.mrf.mxu0
  %v329 = vadd.f32 0.0, %v328
  %v330 = vpop.f32.mrf.mxu0
  %331 = vmatprep.mubr.f32.mxu0 0.0
  %332 = vmatmul.mubr.f32.gmra.mxu0 %v232
  %v333 = vpop.f32.mrf.mxu0
  %v334 = vadd.f32 0.0, %v333
  %v335 = vpop.f32.mrf.mxu0
  %336 = vmatprep.mubr.f32.mxu0 0.0
  %337 = vmatmul.mubr.f32.gmra.mxu0 %v235
  %v338 = vpop.f32.mrf.mxu0
  %v339 = vadd.f32 0.0, %v338
  %v340 = vpop.f32.mrf.mxu0
  %341 = vdwg.mxu0
  %v342 = vadd.f32 %v51, %v75
  %v343 = vadd.f32 %v52, %v76
  %v344 = vadd.f32 %v53, %v77
  %v345 = vadd.f32 %v54, %v78
  %v346 = vadd.f32 %v55, %v79
  %v347 = vadd.f32 %v56, %v80
  %v348 = vadd.f32 %v57, %v81
  %v349 = vadd.f32 %v58, %v82
  %v351 = vsel %vm83, %v342, 0
  %v354 = vsel %vm83, %v343, 0
  %v357 = vsel %vm83, %v344, 0
  %v360 = vsel %vm83, %v345, 0
  %v363 = vsel %vm83, %v346, 0
  %v366 = vsel %vm83, %v347, 0
  %v369 = vsel %vm83, %v348, 0
  %v372 = vsel %vm83, %v349, 0
  %374 = vmatprep.subr.mxu0 0.0
  %375 = vmatpush1.msra.mxu0 0.0
  %376 = vmatprep.subr.mxu0 0.0
  %377 = vmatpush1.msra.mxu0 0.0
  %378 = vmatprep.subr.mxu0 0.0
  %379 = vmatpush1.msra.mxu0 0.0
  %380 = vmatprep.subr.mxu0 0.0
  %381 = vmatpush1.msra.mxu0 0.0
  %382 = vmatprep.subr.mxu0 0.0
  %383 = vmatpush1.msra.mxu0 0.0
  %384 = vmatprep.subr.mxu0 0.0
  %385 = vmatpush1.msra.mxu0 0.0
  %386 = vmatprep.subr.mxu0 0.0
  %387 = vmatpush1.msra.mxu0 0.0
  %388 = vmatprep.subr.mxu0 0.0
  %389 = vmatpush1.msra.mxu0 0.0
  %390 = vmatprep.subr.mxu0 0.0
  %391 = vmatpush1.msra.mxu0 0.0
  %392 = vmatprep.subr.mxu0 0.0
  %393 = vmatpush1.msra.mxu0 0.0
  %394 = vmatprep.subr.mxu0 0.0
  %395 = vmatpush1.msra.mxu0 0.0
  %396 = vmatprep.subr.mxu0 0.0
  %397 = vmatpush1.msra.mxu0 0.0
  %398 = vmatprep.subr.mxu0 0.0
  %399 = vmatpush1.msra.mxu0 %v34
  %400 = vmatprep.subr.mxu0 0.0
  %401 = vmatpush1.msra.mxu0 %v33
  %402 = vmatprep.subr.mxu0 0.0
  %403 = vmatpush1.msra.mxu0 %v32
  %404 = vmatprep.subr.mxu0 0.0
  %405 = vmatpush1.msra.mxu0 %v31
  %406 = vmatprep.subr.mxu0 0.0
  %407 = vmatpush2.msra.mxu0 0.0
  %408 = vmatprep.subr.mxu0 0.0
  %409 = vmatpush2.msra.mxu0 0.0
  %410 = vmatprep.subr.mxu0 0.0
  %411 = vmatpush2.msra.mxu0 0.0
  %412 = vmatprep.subr.mxu0 0.0
  %413 = vmatpush2.msra.mxu0 0.0
  %414 = vmatprep.subr.mxu0 0.0
  %415 = vmatpush2.msra.mxu0 0.0
  %416 = vmatprep.subr.mxu0 0.0
  %417 = vmatpush2.msra.mxu0 0.0
  %418 = vmatprep.subr.mxu0 0.0
  %419 = vmatpush2.msra.mxu0 0.0
  %420 = vmatprep.subr.mxu0 0.0
  %421 = vmatpush2.msra.mxu0 0.0
  %422 = vmatprep.subr.mxu0 0.0
  %423 = vmatpush2.msra.mxu0 0.0
  %424 = vmatprep.subr.mxu0 0.0
  %425 = vmatpush2.msra.mxu0 0.0
  %426 = vmatprep.subr.mxu0 0.0
  %427 = vmatpush2.msra.mxu0 0.0
  %428 = vmatprep.subr.mxu0 0.0
  %429 = vmatpush2.msra.mxu0 0.0
  %430 = vmatprep.subr.mxu0 0.0
  %431 = vmatpush2.msra.mxu0 0.0
  %432 = vmatprep.subr.mxu0 0.0
  %433 = vmatpush2.msra.mxu0 0.0
  %434 = vmatprep.subr.mxu0 0.0
  %435 = vmatpush2.msra.mxu0 0.0
  %436 = vmatprep.subr.mxu0 0.0
  %437 = vmatpush2.msra.mxu0 0.0
  %438 = vmatprep.mubr.f32.mxu0 0.0
  %439 = vmatmul.mubr.f32.gmra.mxu0 %v351
  %v440 = vpop.f32.mrf.mxu0
  %v441 = vadd.f32 0.0, %v440
  %v442 = vpop.f32.mrf.mxu0
  %443 = vmatprep.mubr.f32.mxu0 0.0
  %444 = vmatmul.mubr.f32.gmra.mxu0 %v354
  %v445 = vpop.f32.mrf.mxu0
  %v446 = vadd.f32 0.0, %v445
  %v447 = vpop.f32.mrf.mxu0
  %448 = vmatprep.mubr.f32.mxu0 0.0
  %449 = vmatmul.mubr.f32.gmra.mxu0 %v357
  %v450 = vpop.f32.mrf.mxu0
  %v451 = vadd.f32 0.0, %v450
  %v452 = vpop.f32.mrf.mxu0
  %453 = vmatprep.mubr.f32.mxu0 0.0
  %454 = vmatmul.mubr.f32.gmra.mxu0 %v360
  %v455 = vpop.f32.mrf.mxu0
  %v456 = vadd.f32 0.0, %v455
  %v457 = vpop.f32.mrf.mxu0
  %458 = vmatprep.mubr.f32.mxu0 0.0
  %459 = vmatmul.mubr.f32.gmra.mxu0 %v363
  %v460 = vpop.f32.mrf.mxu0
  %v461 = vadd.f32 0.0, %v460
  %v462 = vpop.f32.mrf.mxu0
  %463 = vmatprep.mubr.f32.mxu0 0.0
  %464 = vmatmul.mubr.f32.gmra.mxu0 %v366
  %v465 = vpop.f32.mrf.mxu0
  %v466 = vadd.f32 0.0, %v465
  %v467 = vpop.f32.mrf.mxu0
  %468 = vmatprep.mubr.f32.mxu0 0.0
  %469 = vmatmul.mubr.f32.gmra.mxu0 %v369
  %v470 = vpop.f32.mrf.mxu0
  %v471 = vadd.f32 0.0, %v470
  %v472 = vpop.f32.mrf.mxu0
  %473 = vmatprep.mubr.f32.mxu0 0.0
  %474 = vmatmul.mubr.f32.gmra.mxu0 %v372
  %v475 = vpop.f32.mrf.mxu0
  %v476 = vadd.f32 0.0, %v475
  %v477 = vpop.f32.mrf.mxu0
  %478 = vdwg.mxu0
  %v479 = vsub.f32 %v175, %v304
  %v480 = vsub.f32 %v180, %v309
  %v481 = vsub.f32 %v185, %v314
  %v482 = vsub.f32 %v190, %v319
  %v483 = vsub.f32 %v195, %v324
  %v484 = vsub.f32 %v200, %v329
  %v485 = vsub.f32 %v205, %v334
  %v486 = vsub.f32 %v210, %v339
  %v487 = vsub.f32 %v441, %v175
  %v488 = vsub.f32 %v446, %v180
  %v489 = vsub.f32 %v451, %v185
  %v490 = vsub.f32 %v456, %v190
  %v491 = vsub.f32 %v461, %v195
  %v492 = vsub.f32 %v466, %v200
  %v493 = vsub.f32 %v471, %v205
  %v494 = vsub.f32 %v476, %v210
  %v495 = vsub.f32 %v487, %v304
  %v496 = vsub.f32 %v488, %v309
  %v497 = vsub.f32 %v489, %v314
  %v498 = vsub.f32 %v490, %v319
  %v499 = vsub.f32 %v491, %v324
  %v500 = vsub.f32 %v492, %v329
  %v501 = vsub.f32 %v493, %v334
  %v502 = vsub.f32 %v494, %v339
  %v503 = vadd.f32 %v479, %v495
  %v504 = vadd.f32 %v480, %v496
  %v505 = vadd.f32 %v481, %v497
  %v506 = vadd.f32 %v482, %v498
  %v507 = vadd.f32 %v483, %v499
  %v508 = vadd.f32 %v484, %v500
  %v509 = vadd.f32 %v485, %v501
  %v510 = vadd.f32 %v486, %v502
  %v512 = vsel %vm83, %v23, 0
  %v515 = vsel %vm83, %v24, 0
  %v518 = vsel %vm83, %v25, 0
  %v521 = vsel %vm83, %v26, 0
  %523 = vmatprep.subr.mxu0 0.0
  %524 = vmatpush1.msra.mxu0 0.0
  %525 = vmatprep.subr.mxu0 0.0
  %526 = vmatpush1.msra.mxu0 0.0
  %527 = vmatprep.subr.mxu0 0.0
  %528 = vmatpush1.msra.mxu0 0.0
  %529 = vmatprep.subr.mxu0 0.0
  %530 = vmatpush1.msra.mxu0 0.0
  %531 = vmatprep.subr.mxu0 0.0
  %532 = vmatpush1.msra.mxu0 0.0
  %533 = vmatprep.subr.mxu0 0.0
  %534 = vmatpush1.msra.mxu0 0.0
  %535 = vmatprep.subr.mxu0 0.0
  %536 = vmatpush1.msra.mxu0 0.0
  %537 = vmatprep.subr.mxu0 0.0
  %538 = vmatpush1.msra.mxu0 0.0
  %539 = vmatprep.subr.mxu0 0.0
  %540 = vmatpush1.msra.mxu0 0.0
  %541 = vmatprep.subr.mxu0 0.0
  %542 = vmatpush1.msra.mxu0 0.0
  %543 = vmatprep.subr.mxu0 0.0
  %544 = vmatpush1.msra.mxu0 0.0
  %545 = vmatprep.subr.mxu0 0.0
  %546 = vmatpush1.msra.mxu0 0.0
  %547 = vmatprep.subr.mxu0 0.0
  %548 = vmatpush1.msra.mxu0 %v482
  %549 = vmatprep.subr.mxu0 0.0
  %550 = vmatpush1.msra.mxu0 %v481
  %551 = vmatprep.subr.mxu0 0.0
  %552 = vmatpush1.msra.mxu0 %v480
  %553 = vmatprep.subr.mxu0 0.0
  %554 = vmatpush1.msra.mxu0 %v479
  %555 = vmatprep.subr.mxu0 0.0
  %556 = vmatpush2.msra.mxu0 0.0
  %557 = vmatprep.subr.mxu0 0.0
  %558 = vmatpush2.msra.mxu0 0.0
  %559 = vmatprep.subr.mxu0 0.0
  %560 = vmatpush2.msra.mxu0 0.0
  %561 = vmatprep.subr.mxu0 0.0
  %562 = vmatpush2.msra.mxu0 0.0
  %563 = vmatprep.subr.mxu0 0.0
  %564 = vmatpush2.msra.mxu0 0.0
  %565 = vmatprep.subr.mxu0 0.0
  %566 = vmatpush2.msra.mxu0 0.0
  %567 = vmatprep.subr.mxu0 0.0
  %568 = vmatpush2.msra.mxu0 0.0
  %569 = vmatprep.subr.mxu0 0.0
  %570 = vmatpush2.msra.mxu0 0.0
  %571 = vmatprep.subr.mxu0 0.0
  %572 = vmatpush2.msra.mxu0 0.0
  %573 = vmatprep.subr.mxu0 0.0
  %574 = vmatpush2.msra.mxu0 0.0
  %575 = vmatprep.subr.mxu0 0.0
  %576 = vmatpush2.msra.mxu0 0.0
  %577 = vmatprep.subr.mxu0 0.0
  %578 = vmatpush2.msra.mxu0 0.0
  %579 = vmatprep.subr.mxu0 0.0
  %580 = vmatpush2.msra.mxu0 0.0
  %581 = vmatprep.subr.mxu0 0.0
  %582 = vmatpush2.msra.mxu0 0.0
  %583 = vmatprep.subr.mxu0 0.0
  %584 = vmatpush2.msra.mxu0 0.0
  %585 = vmatprep.subr.mxu0 0.0
  %586 = vmatpush2.msra.mxu0 0.0
  %587 = vmatprep.mubr.f32.mxu0 0.0
  %588 = vmatmul.mubr.f32.gmra.mxu0 %v512
  %v589 = vpop.f32.mrf.mxu0
  %v590 = vadd.f32 0.0, %v589
  %v591 = vpop.f32.mrf.mxu0
  %592 = vmatprep.mubr.f32.mxu0 0.0
  %593 = vmatmul.mubr.f32.gmra.mxu0 %v515
  %v594 = vpop.f32.mrf.mxu0
  %v595 = vadd.f32 0.0, %v594
  %v596 = vpop.f32.mrf.mxu0
  %597 = vmatprep.mubr.f32.mxu0 0.0
  %598 = vmatmul.mubr.f32.gmra.mxu0 %v518
  %v599 = vpop.f32.mrf.mxu0
  %v600 = vadd.f32 0.0, %v599
  %v601 = vpop.f32.mrf.mxu0
  %602 = vmatprep.mubr.f32.mxu0 0.0
  %603 = vmatmul.mubr.f32.gmra.mxu0 %v521
  %v604 = vpop.f32.mrf.mxu0
  %v605 = vadd.f32 0.0, %v604
  %v606 = vpop.f32.mrf.mxu0
  %607 = vdwg.mxu0
  %v609 = vsel %vm83, %v27, 0
  %v612 = vsel %vm83, %v28, 0
  %v615 = vsel %vm83, %v29, 0
  %v618 = vsel %vm83, %v30, 0
  %620 = vmatprep.subr.mxu0 0.0
  %621 = vmatpush1.msra.mxu0 0.0
  %622 = vmatprep.subr.mxu0 0.0
  %623 = vmatpush1.msra.mxu0 0.0
  %624 = vmatprep.subr.mxu0 0.0
  %625 = vmatpush1.msra.mxu0 0.0
  %626 = vmatprep.subr.mxu0 0.0
  %627 = vmatpush1.msra.mxu0 0.0
  %628 = vmatprep.subr.mxu0 0.0
  %629 = vmatpush1.msra.mxu0 0.0
  %630 = vmatprep.subr.mxu0 0.0
  %631 = vmatpush1.msra.mxu0 0.0
  %632 = vmatprep.subr.mxu0 0.0
  %633 = vmatpush1.msra.mxu0 0.0
  %634 = vmatprep.subr.mxu0 0.0
  %635 = vmatpush1.msra.mxu0 0.0
  %636 = vmatprep.subr.mxu0 0.0
  %637 = vmatpush1.msra.mxu0 0.0
  %638 = vmatprep.subr.mxu0 0.0
  %639 = vmatpush1.msra.mxu0 0.0
  %640 = vmatprep.subr.mxu0 0.0
  %641 = vmatpush1.msra.mxu0 0.0
  %642 = vmatprep.subr.mxu0 0.0
  %643 = vmatpush1.msra.mxu0 0.0
  %644 = vmatprep.subr.mxu0 0.0
  %645 = vmatpush1.msra.mxu0 %v498
  %646 = vmatprep.subr.mxu0 0.0
  %647 = vmatpush1.msra.mxu0 %v497
  %648 = vmatprep.subr.mxu0 0.0
  %649 = vmatpush1.msra.mxu0 %v496
  %650 = vmatprep.subr.mxu0 0.0
  %651 = vmatpush1.msra.mxu0 %v495
  %652 = vmatprep.subr.mxu0 0.0
  %653 = vmatpush2.msra.mxu0 0.0
  %654 = vmatprep.subr.mxu0 0.0
  %655 = vmatpush2.msra.mxu0 0.0
  %656 = vmatprep.subr.mxu0 0.0
  %657 = vmatpush2.msra.mxu0 0.0
  %658 = vmatprep.subr.mxu0 0.0
  %659 = vmatpush2.msra.mxu0 0.0
  %660 = vmatprep.subr.mxu0 0.0
  %661 = vmatpush2.msra.mxu0 0.0
  %662 = vmatprep.subr.mxu0 0.0
  %663 = vmatpush2.msra.mxu0 0.0
  %664 = vmatprep.subr.mxu0 0.0
  %665 = vmatpush2.msra.mxu0 0.0
  %666 = vmatprep.subr.mxu0 0.0
  %667 = vmatpush2.msra.mxu0 0.0
  %668 = vmatprep.subr.mxu0 0.0
  %669 = vmatpush2.msra.mxu0 0.0
  %670 = vmatprep.subr.mxu0 0.0
  %671 = vmatpush2.msra.mxu0 0.0
  %672 = vmatprep.subr.mxu0 0.0
  %673 = vmatpush2.msra.mxu0 0.0
  %674 = vmatprep.subr.mxu0 0.0
  %675 = vmatpush2.msra.mxu0 0.0
  %676 = vmatprep.subr.mxu0 0.0
  %677 = vmatpush2.msra.mxu0 0.0
  %678 = vmatprep.subr.mxu0 0.0
  %679 = vmatpush2.msra.mxu0 0.0
  %680 = vmatprep.subr.mxu0 0.0
  %681 = vmatpush2.msra.mxu0 0.0
  %682 = vmatprep.subr.mxu0 0.0
  %683 = vmatpush2.msra.mxu0 0.0
  %684 = vmatprep.mubr.f32.mxu0 0.0
  %685 = vmatmul.mubr.f32.gmra.mxu0 %v609
  %v686 = vpop.f32.mrf.mxu0
  %v687 = vadd.f32 0.0, %v686
  %v688 = vpop.f32.mrf.mxu0
  %689 = vmatprep.mubr.f32.mxu0 0.0
  %690 = vmatmul.mubr.f32.gmra.mxu0 %v612
  %v691 = vpop.f32.mrf.mxu0
  %v692 = vadd.f32 0.0, %v691
  %v693 = vpop.f32.mrf.mxu0
  %694 = vmatprep.mubr.f32.mxu0 0.0
  %695 = vmatmul.mubr.f32.gmra.mxu0 %v615
  %v696 = vpop.f32.mrf.mxu0
  %v697 = vadd.f32 0.0, %v696
  %v698 = vpop.f32.mrf.mxu0
  %699 = vmatprep.mubr.f32.mxu0 0.0
  %700 = vmatmul.mubr.f32.gmra.mxu0 %v618
  %v701 = vpop.f32.mrf.mxu0
  %v702 = vadd.f32 0.0, %v701
  %v703 = vpop.f32.mrf.mxu0
  %704 = vdwg.mxu0
  %v706 = vsel %vm83, %v31, 0
  %v709 = vsel %vm83, %v32, 0
  %v712 = vsel %vm83, %v33, 0
  %v715 = vsel %vm83, %v34, 0
  %717 = vmatprep.subr.mxu0 0.0
  %718 = vmatpush1.msra.mxu0 0.0
  %719 = vmatprep.subr.mxu0 0.0
  %720 = vmatpush1.msra.mxu0 0.0
  %721 = vmatprep.subr.mxu0 0.0
  %722 = vmatpush1.msra.mxu0 0.0
  %723 = vmatprep.subr.mxu0 0.0
  %724 = vmatpush1.msra.mxu0 0.0
  %725 = vmatprep.subr.mxu0 0.0
  %726 = vmatpush1.msra.mxu0 0.0
  %727 = vmatprep.subr.mxu0 0.0
  %728 = vmatpush1.msra.mxu0 0.0
  %729 = vmatprep.subr.mxu0 0.0
  %730 = vmatpush1.msra.mxu0 0.0
  %731 = vmatprep.subr.mxu0 0.0
  %732 = vmatpush1.msra.mxu0 0.0
  %733 = vmatprep.subr.mxu0 0.0
  %734 = vmatpush1.msra.mxu0 0.0
  %735 = vmatprep.subr.mxu0 0.0
  %736 = vmatpush1.msra.mxu0 0.0
  %737 = vmatprep.subr.mxu0 0.0
  %738 = vmatpush1.msra.mxu0 0.0
  %739 = vmatprep.subr.mxu0 0.0
  %740 = vmatpush1.msra.mxu0 0.0
  %741 = vmatprep.subr.mxu0 0.0
  %742 = vmatpush1.msra.mxu0 %v506
  %743 = vmatprep.subr.mxu0 0.0
  %744 = vmatpush1.msra.mxu0 %v505
  %745 = vmatprep.subr.mxu0 0.0
  %746 = vmatpush1.msra.mxu0 %v504
  %747 = vmatprep.subr.mxu0 0.0
  %748 = vmatpush1.msra.mxu0 %v503
  %749 = vmatprep.subr.mxu0 0.0
  %750 = vmatpush2.msra.mxu0 0.0
  %751 = vmatprep.subr.mxu0 0.0
  %752 = vmatpush2.msra.mxu0 0.0
  %753 = vmatprep.subr.mxu0 0.0
  %754 = vmatpush2.msra.mxu0 0.0
  %755 = vmatprep.subr.mxu0 0.0
  %756 = vmatpush2.msra.mxu0 0.0
  %757 = vmatprep.subr.mxu0 0.0
  %758 = vmatpush2.msra.mxu0 0.0
  %759 = vmatprep.subr.mxu0 0.0
  %760 = vmatpush2.msra.mxu0 0.0
  %761 = vmatprep.subr.mxu0 0.0
  %762 = vmatpush2.msra.mxu0 0.0
  %763 = vmatprep.subr.mxu0 0.0
  %764 = vmatpush2.msra.mxu0 0.0
  %765 = vmatprep.subr.mxu0 0.0
  %766 = vmatpush2.msra.mxu0 0.0
  %767 = vmatprep.subr.mxu0 0.0
  %768 = vmatpush2.msra.mxu0 0.0
  %769 = vmatprep.subr.mxu0 0.0
  %770 = vmatpush2.msra.mxu0 0.0
  %771 = vmatprep.subr.mxu0 0.0
  %772 = vmatpush2.msra.mxu0 0.0
  %773 = vmatprep.subr.mxu0 0.0
  %774 = vmatpush2.msra.mxu0 0.0
  %775 = vmatprep.subr.mxu0 0.0
  %776 = vmatpush2.msra.mxu0 0.0
  %777 = vmatprep.subr.mxu0 0.0
  %778 = vmatpush2.msra.mxu0 0.0
  %779 = vmatprep.subr.mxu0 0.0
  %780 = vmatpush2.msra.mxu0 0.0
  %781 = vmatprep.mubr.f32.mxu0 0.0
  %782 = vmatmul.mubr.f32.gmra.mxu0 %v706
  %v783 = vpop.f32.mrf.mxu0
  %v784 = vadd.f32 0.0, %v783
  %v785 = vpop.f32.mrf.mxu0
  %786 = vmatprep.mubr.f32.mxu0 0.0
  %787 = vmatmul.mubr.f32.gmra.mxu0 %v709
  %v788 = vpop.f32.mrf.mxu0
  %v789 = vadd.f32 0.0, %v788
  %v790 = vpop.f32.mrf.mxu0
  %791 = vmatprep.mubr.f32.mxu0 0.0
  %792 = vmatmul.mubr.f32.gmra.mxu0 %v712
  %v793 = vpop.f32.mrf.mxu0
  %v794 = vadd.f32 0.0, %v793
  %v795 = vpop.f32.mrf.mxu0
  %796 = vmatprep.mubr.f32.mxu0 0.0
  %797 = vmatmul.mubr.f32.gmra.mxu0 %v715
  %v798 = vpop.f32.mrf.mxu0
  %v799 = vadd.f32 0.0, %v798
  %v800 = vpop.f32.mrf.mxu0
  %801 = vdwg.mxu0
  %v802 = vsub.f32 %v590, %v687
  %v803 = vsub.f32 %v595, %v692
  %v804 = vsub.f32 %v600, %v697
  %v805 = vsub.f32 %v605, %v702
  %v806 = vsub.f32 %v784, %v590
  %v807 = vsub.f32 %v789, %v595
  %v808 = vsub.f32 %v794, %v600
  %v809 = vsub.f32 %v799, %v605
  %v810 = vsub.f32 %v806, %v687
  %v811 = vsub.f32 %v807, %v692
  %v812 = vsub.f32 %v808, %v697
  %v813 = vsub.f32 %v809, %v702
  %v814 = vmul.f32 %v802, %v802
  %v815 = vmul.f32 %v803, %v803
  %v816 = vmul.f32 %v804, %v804
  %v817 = vmul.f32 %v805, %v805
  %v818 = vmul.f32 %v810, %v810
  %v819 = vmul.f32 %v811, %v811
  %v820 = vmul.f32 %v812, %v812
  %v821 = vmul.f32 %v813, %v813
  %v822 = vadd.f32 %v814, %v818
  %v823 = vadd.f32 %v815, %v819
  %v824 = vadd.f32 %v816, %v820
  %v825 = vadd.f32 %v817, %v821
  %v826 = vrsqrt.pop %v822
  %v827 = vmul.f32 %v822, %v826
  %vm828 = vcmp.eq.f32.partialorder %v822, inf
  %v829 = vsel %vm828, %v822, %v827
  %vm830 = vcmp.eq.f32.partialorder %v822, 0.0
  %v831 = vand.u32 %v822, 2147483648
  %v832 = vsel %vm830, %v831, %v829
  %v833 = vrsqrt.pop %v823
  %v834 = vmul.f32 %v823, %v833
  %vm835 = vcmp.eq.f32.partialorder %v823, inf
  %v836 = vsel %vm835, %v823, %v834
  %vm837 = vcmp.eq.f32.partialorder %v823, 0.0
  %v838 = vand.u32 %v823, 2147483648
  %v839 = vsel %vm837, %v838, %v836
  %v840 = vrsqrt.pop %v824
  %v841 = vmul.f32 %v824, %v840
  %vm842 = vcmp.eq.f32.partialorder %v824, inf
  %v843 = vsel %vm842, %v824, %v841
  %vm844 = vcmp.eq.f32.partialorder %v824, 0.0
  %v845 = vand.u32 %v824, 2147483648
  %v846 = vsel %vm844, %v845, %v843
  %v847 = vrsqrt.pop %v825
  %v848 = vmul.f32 %v825, %v847
  %vm849 = vcmp.eq.f32.partialorder %v825, inf
  %v850 = vsel %vm849, %v825, %v848
  %vm851 = vcmp.eq.f32.partialorder %v825, 0.0
  %v852 = vand.u32 %v825, 2147483648
  %v853 = vsel %vm851, %v852, %v850
  %854 = vst.msk [vmem:[%s6] sm:$0xff] %vm83, %v832
  %855 = vst.msk [vmem:[%s6 + $0x8] sm:$0xff] %vm83, %v839
  %856 = vst.msk [vmem:[%s6 + $0x10] sm:$0xff] %vm83, %v846
  %857 = vst.msk [vmem:[%s6 + $0x18] sm:$0xff] %vm83, %v853
  %858 = vmatprep.subr.mxu0 0.0
  %859 = vmatpush1.msra.mxu0 0.0
  %860 = vmatprep.subr.mxu0 0.0
  %861 = vmatpush1.msra.mxu0 0.0
  %862 = vmatprep.subr.mxu0 0.0
  %863 = vmatpush1.msra.mxu0 0.0
  %864 = vmatprep.subr.mxu0 0.0
  %865 = vmatpush1.msra.mxu0 0.0
  %866 = vmatprep.subr.mxu0 0.0
  %867 = vmatpush1.msra.mxu0 0.0
  %868 = vmatprep.subr.mxu0 0.0
  %869 = vmatpush1.msra.mxu0 0.0
  %870 = vmatprep.subr.mxu0 0.0
  %871 = vmatpush1.msra.mxu0 0.0
  %872 = vmatprep.subr.mxu0 0.0
  %873 = vmatpush1.msra.mxu0 0.0
  %874 = vmatprep.subr.mxu0 0.0
  %875 = vmatpush1.msra.mxu0 0.0
  %876 = vmatprep.subr.mxu0 0.0
  %877 = vmatpush1.msra.mxu0 0.0
  %878 = vmatprep.subr.mxu0 0.0
  %879 = vmatpush1.msra.mxu0 0.0
  %880 = vmatprep.subr.mxu0 0.0
  %881 = vmatpush1.msra.mxu0 0.0
  %882 = vmatprep.subr.mxu0 0.0
  %883 = vmatpush1.msra.mxu0 %v486
  %884 = vmatprep.subr.mxu0 0.0
  %885 = vmatpush1.msra.mxu0 %v485
  %886 = vmatprep.subr.mxu0 0.0
  %887 = vmatpush1.msra.mxu0 %v484
  %888 = vmatprep.subr.mxu0 0.0
  %889 = vmatpush1.msra.mxu0 %v483
  %890 = vmatprep.subr.mxu0 0.0
  %891 = vmatpush2.msra.mxu0 0.0
  %892 = vmatprep.subr.mxu0 0.0
  %893 = vmatpush2.msra.mxu0 0.0
  %894 = vmatprep.subr.mxu0 0.0
  %895 = vmatpush2.msra.mxu0 0.0
  %896 = vmatprep.subr.mxu0 0.0
  %897 = vmatpush2.msra.mxu0 0.0
  %898 = vmatprep.subr.mxu0 0.0
  %899 = vmatpush2.msra.mxu0 0.0
  %900 = vmatprep.subr.mxu0 0.0
  %901 = vmatpush2.msra.mxu0 0.0
  %902 = vmatprep.subr.mxu0 0.0
  %903 = vmatpush2.msra.mxu0 0.0
  %904 = vmatprep.subr.mxu0 0.0
  %905 = vmatpush2.msra.mxu0 0.0
  %906 = vmatprep.subr.mxu0 0.0
  %907 = vmatpush2.msra.mxu0 0.0
  %908 = vmatprep.subr.mxu0 0.0
  %909 = vmatpush2.msra.mxu0 0.0
  %910 = vmatprep.subr.mxu0 0.0
  %911 = vmatpush2.msra.mxu0 0.0
  %912 = vmatprep.subr.mxu0 0.0
  %913 = vmatpush2.msra.mxu0 0.0
  %914 = vmatprep.subr.mxu0 0.0
  %915 = vmatpush2.msra.mxu0 0.0
  %916 = vmatprep.subr.mxu0 0.0
  %917 = vmatpush2.msra.mxu0 0.0
  %918 = vmatprep.subr.mxu0 0.0
  %919 = vmatpush2.msra.mxu0 0.0
  %920 = vmatprep.subr.mxu0 0.0
  %921 = vmatpush2.msra.mxu0 0.0
  %922 = vmatprep.mubr.f32.mxu0 0.0
  %923 = vmatmul.mubr.f32.gmra.mxu0 %v512
  %v924 = vpop.f32.mrf.mxu0
  %v925 = vadd.f32 0.0, %v924
  %v926 = vpop.f32.mrf.mxu0
  %927 = vmatprep.mubr.f32.mxu0 0.0
  %928 = vmatmul.mubr.f32.gmra.mxu0 %v515
  %v929 = vpop.f32.mrf.mxu0
  %v930 = vadd.f32 0.0, %v929
  %v931 = vpop.f32.mrf.mxu0
  %932 = vmatprep.mubr.f32.mxu0 0.0
  %933 = vmatmul.mubr.f32.gmra.mxu0 %v518
  %v934 = vpop.f32.mrf.mxu0
  %v935 = vadd.f32 0.0, %v934
  %v936 = vpop.f32.mrf.mxu0
  %937 = vmatprep.mubr.f32.mxu0 0.0
  %938 = vmatmul.mubr.f32.gmra.mxu0 %v521
  %v939 = vpop.f32.mrf.mxu0
  %v940 = vadd.f32 0.0, %v939
  %v941 = vpop.f32.mrf.mxu0
  %942 = vdwg.mxu0
  %943 = vmatprep.subr.mxu0 0.0
  %944 = vmatpush1.msra.mxu0 0.0
  %945 = vmatprep.subr.mxu0 0.0
  %946 = vmatpush1.msra.mxu0 0.0
  %947 = vmatprep.subr.mxu0 0.0
  %948 = vmatpush1.msra.mxu0 0.0
  %949 = vmatprep.subr.mxu0 0.0
  %950 = vmatpush1.msra.mxu0 0.0
  %951 = vmatprep.subr.mxu0 0.0
  %952 = vmatpush1.msra.mxu0 0.0
  %953 = vmatprep.subr.mxu0 0.0
  %954 = vmatpush1.msra.mxu0 0.0
  %955 = vmatprep.subr.mxu0 0.0
  %956 = vmatpush1.msra.mxu0 0.0
  %957 = vmatprep.subr.mxu0 0.0
  %958 = vmatpush1.msra.mxu0 0.0
  %959 = vmatprep.subr.mxu0 0.0
  %960 = vmatpush1.msra.mxu0 0.0
  %961 = vmatprep.subr.mxu0 0.0
  %962 = vmatpush1.msra.mxu0 0.0
  %963 = vmatprep.subr.mxu0 0.0
  %964 = vmatpush1.msra.mxu0 0.0
  %965 = vmatprep.subr.mxu0 0.0
  %966 = vmatpush1.msra.mxu0 0.0
  %967 = vmatprep.subr.mxu0 0.0
  %968 = vmatpush1.msra.mxu0 %v502
  %969 = vmatprep.subr.mxu0 0.0
  %970 = vmatpush1.msra.mxu0 %v501
  %971 = vmatprep.subr.mxu0 0.0
  %972 = vmatpush1.msra.mxu0 %v500
  %973 = vmatprep.subr.mxu0 0.0
  %974 = vmatpush1.msra.mxu0 %v499
  %975 = vmatprep.subr.mxu0 0.0
  %976 = vmatpush2.msra.mxu0 0.0
  %977 = vmatprep.subr.mxu0 0.0
  %978 = vmatpush2.msra.mxu0 0.0
  %979 = vmatprep.subr.mxu0 0.0
  %980 = vmatpush2.msra.mxu0 0.0
  %981 = vmatprep.subr.mxu0 0.0
  %982 = vmatpush2.msra.mxu0 0.0
  %983 = vmatprep.subr.mxu0 0.0
  %984 = vmatpush2.msra.mxu0 0.0
  %985 = vmatprep.subr.mxu0 0.0
  %986 = vmatpush2.msra.mxu0 0.0
  %987 = vmatprep.subr.mxu0 0.0
  %988 = vmatpush2.msra.mxu0 0.0
  %989 = vmatprep.subr.mxu0 0.0
  %990 = vmatpush2.msra.mxu0 0.0
  %991 = vmatprep.subr.mxu0 0.0
  %992 = vmatpush2.msra.mxu0 0.0
  %993 = vmatprep.subr.mxu0 0.0
  %994 = vmatpush2.msra.mxu0 0.0
  %995 = vmatprep.subr.mxu0 0.0
  %996 = vmatpush2.msra.mxu0 0.0
  %997 = vmatprep.subr.mxu0 0.0
  %998 = vmatpush2.msra.mxu0 0.0
  %999 = vmatprep.subr.mxu0 0.0
  %1000 = vmatpush2.msra.mxu0 0.0
  %1001 = vmatprep.subr.mxu0 0.0
  %1002 = vmatpush2.msra.mxu0 0.0
  %1003 = vmatprep.subr.mxu0 0.0
  %1004 = vmatpush2.msra.mxu0 0.0
  %1005 = vmatprep.subr.mxu0 0.0
  %1006 = vmatpush2.msra.mxu0 0.0
  %1007 = vmatprep.mubr.f32.mxu0 0.0
  %1008 = vmatmul.mubr.f32.gmra.mxu0 %v609
  %v1009 = vpop.f32.mrf.mxu0
  %v1010 = vadd.f32 0.0, %v1009
  %v1011 = vpop.f32.mrf.mxu0
  %1012 = vmatprep.mubr.f32.mxu0 0.0
  %1013 = vmatmul.mubr.f32.gmra.mxu0 %v612
  %v1014 = vpop.f32.mrf.mxu0
  %v1015 = vadd.f32 0.0, %v1014
  %v1016 = vpop.f32.mrf.mxu0
  %1017 = vmatprep.mubr.f32.mxu0 0.0
  %1018 = vmatmul.mubr.f32.gmra.mxu0 %v615
  %v1019 = vpop.f32.mrf.mxu0
  %v1020 = vadd.f32 0.0, %v1019
  %v1021 = vpop.f32.mrf.mxu0
  %1022 = vmatprep.mubr.f32.mxu0 0.0
  %1023 = vmatmul.mubr.f32.gmra.mxu0 %v618
  %v1024 = vpop.f32.mrf.mxu0
  %v1025 = vadd.f32 0.0, %v1024
  %v1026 = vpop.f32.mrf.mxu0
  %1027 = vdwg.mxu0
  %1028 = vmatprep.subr.mxu0 0.0
  %1029 = vmatpush1.msra.mxu0 0.0
  %1030 = vmatprep.subr.mxu0 0.0
  %1031 = vmatpush1.msra.mxu0 0.0
  %1032 = vmatprep.subr.mxu0 0.0
  %1033 = vmatpush1.msra.mxu0 0.0
  %1034 = vmatprep.subr.mxu0 0.0
  %1035 = vmatpush1.msra.mxu0 0.0
  %1036 = vmatprep.subr.mxu0 0.0
  %1037 = vmatpush1.msra.mxu0 0.0
  %1038 = vmatprep.subr.mxu0 0.0
  %1039 = vmatpush1.msra.mxu0 0.0
  %1040 = vmatprep.subr.mxu0 0.0
  %1041 = vmatpush1.msra.mxu0 0.0
  %1042 = vmatprep.subr.mxu0 0.0
  %1043 = vmatpush1.msra.mxu0 0.0
  %1044 = vmatprep.subr.mxu0 0.0
  %1045 = vmatpush1.msra.mxu0 0.0
  %1046 = vmatprep.subr.mxu0 0.0
  %1047 = vmatpush1.msra.mxu0 0.0
  %1048 = vmatprep.subr.mxu0 0.0
  %1049 = vmatpush1.msra.mxu0 0.0
  %1050 = vmatprep.subr.mxu0 0.0
  %1051 = vmatpush1.msra.mxu0 0.0
  %1052 = vmatprep.subr.mxu0 0.0
  %1053 = vmatpush1.msra.mxu0 %v510
  %1054 = vmatprep.subr.mxu0 0.0
  %1055 = vmatpush1.msra.mxu0 %v509
  %1056 = vmatprep.subr.mxu0 0.0
  %1057 = vmatpush1.msra.mxu0 %v508
  %1058 = vmatprep.subr.mxu0 0.0
  %1059 = vmatpush1.msra.mxu0 %v507
  %1060 = vmatprep.subr.mxu0 0.0
  %1061 = vmatpush2.msra.mxu0 0.0
  %1062 = vmatprep.subr.mxu0 0.0
  %1063 = vmatpush2.msra.mxu0 0.0
  %1064 = vmatprep.subr.mxu0 0.0
  %1065 = vmatpush2.msra.mxu0 0.0
  %1066 = vmatprep.subr.mxu0 0.0
  %1067 = vmatpush2.msra.mxu0 0.0
  %1068 = vmatprep.subr.mxu0 0.0
  %1069 = vmatpush2.msra.mxu0 0.0
  %1070 = vmatprep.subr.mxu0 0.0
  %1071 = vmatpush2.msra.mxu0 0.0
  %1072 = vmatprep.subr.mxu0 0.0
  %1073 = vmatpush2.msra.mxu0 0.0
  %1074 = vmatprep.subr.mxu0 0.0
  %1075 = vmatpush2.msra.mxu0 0.0
  %1076 = vmatprep.subr.mxu0 0.0
  %1077 = vmatpush2.msra.mxu0 0.0
  %1078 = vmatprep.subr.mxu0 0.0
  %1079 = vmatpush2.msra.mxu0 0.0
  %1080 = vmatprep.subr.mxu0 0.0
  %1081 = vmatpush2.msra.mxu0 0.0
  %1082 = vmatprep.subr.mxu0 0.0
  %1083 = vmatpush2.msra.mxu0 0.0
  %1084 = vmatprep.subr.mxu0 0.0
  %1085 = vmatpush2.msra.mxu0 0.0
  %1086 = vmatprep.subr.mxu0 0.0
  %1087 = vmatpush2.msra.mxu0 0.0
  %1088 = vmatprep.subr.mxu0 0.0
  %1089 = vmatpush2.msra.mxu0 0.0
  %1090 = vmatprep.subr.mxu0 0.0
  %1091 = vmatpush2.msra.mxu0 0.0
  %1092 = vmatprep.mubr.f32.mxu0 0.0
  %1093 = vmatmul.mubr.f32.gmra.mxu0 %v706
  %v1094 = vpop.f32.mrf.mxu0
  %v1095 = vadd.f32 0.0, %v1094
  %v1096 = vpop.f32.mrf.mxu0
  %1097 = vmatprep.mubr.f32.mxu0 0.0
  %1098 = vmatmul.mubr.f32.gmra.mxu0 %v709
  %v1099 = vpop.f32.mrf.mxu0
  %v1100 = vadd.f32 0.0, %v1099
  %v1101 = vpop.f32.mrf.mxu0
  %1102 = vmatprep.mubr.f32.mxu0 0.0
  %1103 = vmatmul.mubr.f32.gmra.mxu0 %v712
  %v1104 = vpop.f32.mrf.mxu0
  %v1105 = vadd.f32 0.0, %v1104
  %v1106 = vpop.f32.mrf.mxu0
  %1107 = vmatprep.mubr.f32.mxu0 0.0
  %1108 = vmatmul.mubr.f32.gmra.mxu0 %v715
  %v1109 = vpop.f32.mrf.mxu0
  %v1110 = vadd.f32 0.0, %v1109
  %v1111 = vpop.f32.mrf.mxu0
  %1112 = vdwg.mxu0
  %v1113 = vsub.f32 %v925, %v1010
  %v1114 = vsub.f32 %v930, %v1015
  %v1115 = vsub.f32 %v935, %v1020
  %v1116 = vsub.f32 %v940, %v1025
  %v1117 = vsub.f32 %v1095, %v925
  %v1118 = vsub.f32 %v1100, %v930
  %v1119 = vsub.f32 %v1105, %v935
  %v1120 = vsub.f32 %v1110, %v940
  %v1121 = vsub.f32 %v1117, %v1010
  %v1122 = vsub.f32 %v1118, %v1015
  %v1123 = vsub.f32 %v1119, %v1020
  %v1124 = vsub.f32 %v1120, %v1025
  %v1125 = vmul.f32 %v1113, %v1113
  %v1126 = vmul.f32 %v1114, %v1114
  %v1127 = vmul.f32 %v1115, %v1115
  %v1128 = vmul.f32 %v1116, %v1116
  %v1129 = vmul.f32 %v1121, %v1121
  %v1130 = vmul.f32 %v1122, %v1122
  %v1131 = vmul.f32 %v1123, %v1123
  %v1132 = vmul.f32 %v1124, %v1124
  %v1133 = vadd.f32 %v1125, %v1129
  %v1134 = vadd.f32 %v1126, %v1130
  %v1135 = vadd.f32 %v1127, %v1131
  %v1136 = vadd.f32 %v1128, %v1132
  %v1137 = vrsqrt.pop %v1133
  %v1138 = vmul.f32 %v1133, %v1137
  %vm1139 = vcmp.eq.f32.partialorder %v1133, inf
  %v1140 = vsel %vm1139, %v1133, %v1138
  %vm1141 = vcmp.eq.f32.partialorder %v1133, 0.0
  %v1142 = vand.u32 %v1133, 2147483648
  %v1143 = vsel %vm1141, %v1142, %v1140
  %v1144 = vrsqrt.pop %v1134
  %v1145 = vmul.f32 %v1134, %v1144
  %vm1146 = vcmp.eq.f32.partialorder %v1134, inf
  %v1147 = vsel %vm1146, %v1134, %v1145
  %vm1148 = vcmp.eq.f32.partialorder %v1134, 0.0
  %v1149 = vand.u32 %v1134, 2147483648
  %v1150 = vsel %vm1148, %v1149, %v1147
  %v1151 = vrsqrt.pop %v1135
  %v1152 = vmul.f32 %v1135, %v1151
  %vm1153 = vcmp.eq.f32.partialorder %v1135, inf
  %v1154 = vsel %vm1153, %v1135, %v1152
  %vm1155 = vcmp.eq.f32.partialorder %v1135, 0.0
  %v1156 = vand.u32 %v1135, 2147483648
  %v1157 = vsel %vm1155, %v1156, %v1154
  %v1158 = vrsqrt.pop %v1136
  %v1159 = vmul.f32 %v1136, %v1158
  %vm1160 = vcmp.eq.f32.partialorder %v1136, inf
  %v1161 = vsel %vm1160, %v1136, %v1159
  %vm1162 = vcmp.eq.f32.partialorder %v1136, 0.0
  %v1163 = vand.u32 %v1136, 2147483648
  %v1164 = vsel %vm1162, %v1163, %v1161
  %1165 = vst.msk [vmem:[%s6 + $0x20] sm:$0xff] %vm83, %v1143
  %1166 = vst.msk [vmem:[%s6 + $0x28] sm:$0xff] %vm83, %v1150
  %1167 = vst.msk [vmem:[%s6 + $0x30] sm:$0xff] %vm83, %v1157
  %1168 = vst.msk [vmem:[%s6 + $0x38] sm:$0xff] %vm83, %v1164
  // Predicated region
  $region26: #{tpu_custom_call.1} parent=0 // pred_check
    _
  $region27: #{tpu_custom_call.1} parent=0 // pred_check_branch
    %1170 = sbr.rel (0) target = $region29
  $region28: #{tpu_custom_call.1} parent=0 // pred_region
    _
  $region29: #{tpu_custom_call.1} parent=0 // pred_fallthru
    _
  // Predicated region
  $region30: #{tpu_custom_call.1} parent=0 // pred_check
    _
  $region31: #{tpu_custom_call.1} parent=0 // pred_check_branch
    %1172 = sbr.rel (0) target = $region33
  $region32: #{tpu_custom_call.1} parent=0 // pred_region
    _
  $region33: #{tpu_custom_call.1} parent=0 // pred_fallthru
    _

</llo_original>
